<compile_context>
chip_gen: v7x
topology: tpu7x:2x2x1
jax: 0.10.0
libtpu: 0.0.40
codegen_flags: <defaults>
</compile_context>

<pallas_src>
import jax
import jax.numpy as jnp
from jax.experimental import pallas as pl
from jax.experimental.pallas import tpu as pltpu


def _pick_tile_b(batch):
    """Largest batch tile <= 512 that evenly divides the batch.

    512 rows keeps the pipeline near the HBM roofline while staying a few MiB
    of VMEM per step (safe for v7x's smaller VMEM); falling back to the full
    batch keeps tiny/odd batches legal under the (8,128) block rule."""
    for t in (512, 256, 128, 64, 32, 16, 8):
        if batch % t == 0:
            return t
    return batch


# ----------------------------- Pallas kernels ------------------------------

def _dense_cat_kernel(*refs):
    """CatBlock DENSE mode: out[:, :D]=dense; out[:, D+s*E:D+(s+1)*E]=sparse_s.

    Direct slice stores — no jnp.concatenate temporary, so VMEM holds each
    slab exactly once and a bigger batch tile fits (matters on v7x)."""
    dense_ref, *rest = refs
    sparse_refs, out_ref = rest[:-1], rest[-1]
    d = dense_ref.shape[-1]
    out_ref[:, :d] = dense_ref[...].astype(out_ref.dtype)
    off = d
    for s_ref in sparse_refs:
        e = s_ref.shape[-1]
        out_ref[:, off:off + e] = s_ref[...].astype(out_ref.dtype)
        off += e


def _emb_linear_kernel(dense_ref, w_ref, b_ref, out_ref):
    """CatBlock EMB mode: only the nn.Linear(num_dense_feat, E) projection.

    The unchanged sparse embeddings never enter the kernel (the wrapper
    re-references the original arrays), eliminating 2*S*B*E bytes of HBM
    read+write that dominated the previous version."""
    out_ref[...] = (
        jnp.dot(dense_ref[...], w_ref[...], preferred_element_type=jnp.float32)
        + b_ref[...]
    ).astype(out_ref.dtype)


# ------------------------------- wrappers -----------------------------------

def cat_block_dense(dense, sparse_list):
    """Concat dense [B, D] with each sparse [B, E_s] along axis 1."""
    B, D = dense.shape
    widths = [s.shape[-1] for s in sparse_list]
    out_w = D + sum(widths)
    tile_b = _pick_tile_b(B)
    grid = (B // tile_b,)

    in_specs = [pl.BlockSpec((tile_b, D), lambda i: (i, 0))]
    in_specs += [pl.BlockSpec((tile_b, w), lambda i: (i, 0)) for w in widths]

    bytes_accessed = 2 * 4 * B * out_w  # read everything once, write once (f32)
    return pl.pallas_call(
        _dense_cat_kernel,
        out_shape=jax.ShapeDtypeStruct((B, out_w), dense.dtype),
        grid=grid,
        in_specs=in_specs,
        out_specs=pl.BlockSpec((tile_b, out_w), lambda i: (i, 0)),
        compiler_params=pltpu.CompilerParams(dimension_semantics=("parallel",)),
        cost_estimate=pl.CostEstimate(flops=0, transcendentals=0,
                                      bytes_accessed=bytes_accessed),
    )(dense, *sparse_list)


def cat_block_emb(dense, w, b):
    """nn.Linear: dense [B, D] @ W [D, E] + b [1, E] -> [B, E]."""
    B, D = dense.shape
    E = w.shape[-1]
    tile_b = _pick_tile_b(B)
    grid = (B // tile_b,)
    bytes_accessed = 4 * (B * D + D * E + E + B * E)
    return pl.pallas_call(
        _emb_linear_kernel,
        out_shape=jax.ShapeDtypeStruct((B, E), dense.dtype),
        grid=grid,
        in_specs=[
            pl.BlockSpec((tile_b, D), lambda i: (i, 0)),
            pl.BlockSpec((D, E), lambda i: (0, 0)),   # tiny; constant block, not re-tiled
            pl.BlockSpec((1, E), lambda i: (0, 0)),   # bias
        ],
        out_specs=pl.BlockSpec((tile_b, E), lambda i: (i, 0)),
        compiler_params=pltpu.CompilerParams(dimension_semantics=("parallel",)),
        cost_estimate=pl.CostEstimate(flops=2 * B * D * E, transcendentals=0,
                                      bytes_accessed=bytes_accessed),
    )(dense, w, b)


# ------------------------------ module wrapper ------------------------------

class CatBlockJAX:
    """JAX/Pallas port of nasrec CatBlock (feat ids == [-1], i.e. all feats)."""

    def __init__(self, mode, block_id, num_dense_feat, comm_embed_dim, key):
        assert mode in ("dense", "emb")
        self.mode = mode
        self.block_id = block_id
        if mode == "emb":
            # create_emb_converter -> nn.Linear(num_dense_feat, comm_embed_dim)
            # torch default init: U(-1/sqrt(fan_in), 1/sqrt(fan_in)); W stored [D, E].
            kw, kb = jax.random.split(key)
            bound = 1.0 / float(num_dense_feat) ** 0.5
            self.w = jax.random.uniform(kw, (num_dense_feat, comm_embed_dim),
                                        jnp.float32, -bound, bound)
            self.b = jax.random.uniform(kb, (1, comm_embed_dim),
                                        jnp.float32, -bound, bound)
        # TODO(synk): dense_as_sparse embedding path (emb_config.dense_as_sparse)
        # is not exercised here; only the default dense->emb Linear converter is built.

    def __call__(self, feat_dict):
        dense = feat_dict['dense'][0]          # feat_dense_id == [-1] -> all dense feats
        sparse_block = feat_dict['sparse'][0]  # feat_sparse_id == [-1] -> all sparse feats
        sparse_keys = sorted(sparse_block)
        sparse_list = [sparse_block[i] for i in sparse_keys]
        if self.mode == "dense":
            p = cat_block_dense(dense, sparse_list)            # [B, D + S*E]
            feat_dict['dense'][self.block_id] = p
        else:
            dense_emb = cat_block_emb(dense, self.w, self.b)   # [B, E]
            # torch: p = stack([dense_emb, sparse_0, ...], dim=1); p[:, i] slices.
            # The sparse slices equal the inputs, so reference them (zero copies).
            out = {0: dense_emb}
            for j, i in enumerate(sparse_keys):
                out[j + 1] = sparse_block[i]
            feat_dict['sparse'][self.block_id] = out
        return feat_dict


# ----------------------------------- main -----------------------------------

if __name__ == "__main__":
    B, D, E, S = 8, 16, 32, 3   # batch, dense feat dim, emb dim, num sparse feats
    key = jax.random.PRNGKey(0)
    k_dense, k_s0, k_s1, k_s2, k_param = jax.random.split(key, 5)

    feat_dict = {
        'dense': {0: jax.random.normal(k_dense, (B, D), jnp.float32)},
        'sparse': {0: {0: jax.random.normal(k_s0, (B, E), jnp.float32),
                       1: jax.random.normal(k_s1, (B, E), jnp.float32),
                       2: jax.random.normal(k_s2, (B, E), jnp.float32)}},
    }

    # --- DENSE-mode CatBlock ---
    blk_dense = CatBlockJAX("dense", block_id=1, num_dense_feat=D,
                            comm_embed_dim=E, key=k_param)
    out_d = blk_dense({'dense': dict(feat_dict['dense']),
                       'sparse': {0: dict(feat_dict['sparse'][0])}})
    p_dense = jax.block_until_ready(out_d['dense'][1])
    ref_dense = jnp.concatenate(
        [feat_dict['dense'][0]] + [feat_dict['sparse'][0][i] for i in range(S)], axis=1)
    assert p_dense.shape == (B, D + S * E)
    assert jnp.allclose(p_dense, ref_dense, atol=1e-6), "DENSE-mode mismatch"

    # --- EMB-mode CatBlock ---
    blk_emb = CatBlockJAX("emb", block_id=2, num_dense_feat=D,
                          comm_embed_dim=E, key=k_param)
    out_e = blk_emb({'dense': dict(feat_dict['dense']),
                     'sparse': {0: dict(feat_dict['sparse'][0])}})
    p_emb = {i: jax.block_until_ready(v) for i, v in out_e['sparse'][2].items()}
    ref_p = jnp.stack(
        [feat_dict['dense'][0] @ blk_emb.w + blk_emb.b[0]]
        + [feat_dict['sparse'][0][i] for i in range(S)], axis=1)  # [B, S+1, E]
    assert len(p_emb) == S + 1
    for i in range(S + 1):
        assert p_emb[i].shape == (B, E)
        assert jnp.allclose(p_emb[i], ref_p[:, i], atol=1e-5), f"EMB-mode feat {i} mismatch"

    print("KERNEL_OK")
</pallas_src>

<mosaic_0001>
module attributes {stable_mosaic.version = 11 : i64} {
  func.func @_dense_cat_kernel(%arg0: i32, %arg1: memref<8x16xf32, #tpu.memory_space<vmem>>, %arg2: memref<8x32xf32, #tpu.memory_space<vmem>>, %arg3: memref<8x32xf32, #tpu.memory_space<vmem>>, %arg4: memref<8x32xf32, #tpu.memory_space<vmem>>, %arg5: memref<8x112xf32, #tpu.memory_space<vmem>>) attributes {dimension_semantics = [#tpu.dimension_semantics<parallel>], iteration_bounds = array<i64: 1>, scalar_prefetch = 0 : i64, scratch_operands = 0 : i64, tpu.core_type = #tpu.core_type<tc>, window_params = [{transform_indices = @transform_0, window_bounds = array<i64: 8, 16>}, {transform_indices = @transform_1, window_bounds = array<i64: 8, 32>}, {transform_indices = @transform_2, window_bounds = array<i64: 8, 32>}, {transform_indices = @transform_3, window_bounds = array<i64: 8, 32>}, {transform_indices = @transform_4, window_bounds = array<i64: 8, 112>}]} {
    %c0 = arith.constant 0 : index
    %c0_0 = arith.constant 0 : index
    %0 = vector.load %arg1[%c0, %c0_0] : memref<8x16xf32, #tpu.memory_space<vmem>>, vector<8x16xf32>
    %c0_1 = arith.constant 0 : index
    %c0_2 = arith.constant 0 : index
    %1 = vector.load %arg5[%c0_1, %c0_2] : memref<8x112xf32, #tpu.memory_space<vmem>>, vector<8x16xf32>
    tpu.vector_store %arg5[%c0_1, %c0_2], %0 {strides = array<i32>} : memref<8x112xf32, #tpu.memory_space<vmem>>, vector<8x16xf32>,
    %c0_3 = arith.constant 0 : index
    %c0_4 = arith.constant 0 : index
    %2 = vector.load %arg2[%c0_3, %c0_4] : memref<8x32xf32, #tpu.memory_space<vmem>>, vector<8x32xf32>
    %c0_5 = arith.constant 0 : index
    %c16 = arith.constant 16 : index
    %3 = vector.load %arg5[%c0_5, %c16] : memref<8x112xf32, #tpu.memory_space<vmem>>, vector<8x32xf32>
    tpu.vector_store %arg5[%c0_5, %c16], %2 {strides = array<i32>} : memref<8x112xf32, #tpu.memory_space<vmem>>, vector<8x32xf32>,
    %c0_6 = arith.constant 0 : index
    %c0_7 = arith.constant 0 : index
    %4 = vector.load %arg3[%c0_6, %c0_7] : memref<8x32xf32, #tpu.memory_space<vmem>>, vector<8x32xf32>
    %c0_8 = arith.constant 0 : index
    %c48 = arith.constant 48 : index
    %5 = vector.load %arg5[%c0_8, %c48] : memref<8x112xf32, #tpu.memory_space<vmem>>, vector<8x32xf32>
    tpu.vector_store %arg5[%c0_8, %c48], %4 {strides = array<i32>} : memref<8x112xf32, #tpu.memory_space<vmem>>, vector<8x32xf32>,
    %c0_9 = arith.constant 0 : index
    %c0_10 = arith.constant 0 : index
    %6 = vector.load %arg4[%c0_9, %c0_10] : memref<8x32xf32, #tpu.memory_space<vmem>>, vector<8x32xf32>
    %c0_11 = arith.constant 0 : index
    %c80 = arith.constant 80 : index
    %7 = vector.load %arg5[%c0_11, %c80] : memref<8x112xf32, #tpu.memory_space<vmem>>, vector<8x32xf32>
    tpu.vector_store %arg5[%c0_11, %c80], %6 {strides = array<i32>} : memref<8x112xf32, #tpu.memory_space<vmem>>, vector<8x32xf32>,
    return
  }
  func.func @transform_0(%arg0: i32) -> (i32, i32) {
    %c0_i32 = arith.constant 0 : i32
    %c0_i32_0 = arith.constant 0 : i32
    return %arg0, %c0_i32 : i32, i32
  }
  func.func @transform_1(%arg0: i32) -> (i32, i32) {
    %c0_i32 = arith.constant 0 : i32
    %c0_i32_0 = arith.constant 0 : i32
    return %arg0, %c0_i32 : i32, i32
  }
  func.func @transform_2(%arg0: i32) -> (i32, i32) {
    %c0_i32 = arith.constant 0 : i32
    %c0_i32_0 = arith.constant 0 : i32
    return %arg0, %c0_i32 : i32, i32
  }
  func.func @transform_3(%arg0: i32) -> (i32, i32) {
    %c0_i32 = arith.constant 0 : i32
    %c0_i32_0 = arith.constant 0 : i32
    return %arg0, %c0_i32 : i32, i32
  }
  func.func @transform_4(%arg0: i32) -> (i32, i32) {
    %c0_i32 = arith.constant 0 : i32
    %c0_i32_0 = arith.constant 0 : i32
    return %arg0, %c0_i32 : i32, i32
  }
}

</mosaic_0001>

<llo_original>
// kernel: tpu_custom_call.1
$region0: #{tpu_custom_call.1}
  #allocation0 [shape = 'u32[]', space=smem, size = 0x4, offset = 0x4, fixed_abs, tag = 'smem constant byte address 0x4 - core index']
  #allocation1 [shape = 'u32[144,128]{1,0:T(1,128)}', space=vmem, size = 0x12000, scoped, tag = 'internal scratch']
  %s0 = inlined_call_operand.hbm [shape: f32[8,16], index: 0, kind: input, shape index: {}]
  %s1 = inlined_call_operand.hbm [shape: f32[8,32], index: 1, kind: input, shape index: {}]
  %s2 = inlined_call_operand.hbm [shape: f32[8,32], index: 2, kind: input, shape index: {}]
  %s3 = inlined_call_operand.vmem [shape: f32[8,32], index: 3, kind: input, shape index: {}]
  %s4 = inlined_call_operand.hbm [shape: f32[8,112], index: 4, kind: output, shape index: {}]
  %s5 = sld [smem:[#allocation0]]
  $region38: #{tpu_custom_call.1} parent=0
    _
  %s7 = ssub.s32 1, %s5
  %s8 = scalar_select 0, %s7, %s5
  $region1: #{tpu_custom_call.1} parent=0
    #allocation2 [shape = 'u8[4096]{0}', space=vmem, size = 0x1000, scoped, tag = 'input window, operand 0, single buffered']
    #allocation3 [shape = 's32[1]{0}', space=sflag, size = 0x4, scoped, tag = 'scoped memory for tpu_custom_call.1']
    #allocation4 [shape = 's32[1]{0}', space=sflag, size = 0x4, scoped, tag = 'scoped memory for tpu_custom_call.1']
    #allocation5 [shape = 'u8[4096]{0}', space=vmem, size = 0x1000, scoped, tag = 'input window, operand 1, single buffered']
    #allocation6 [shape = 's32[1]{0}', space=sflag, size = 0x4, scoped, tag = 'scoped memory for tpu_custom_call.1']
    #allocation7 [shape = 'u8[4096]{0}', space=vmem, size = 0x1000, scoped, tag = 'input window, operand 2, single buffered']
    #allocation8 [shape = 'u8[4096]{0}', space=vmem, size = 0x1000, scoped, tag = 'output window, operand 0, single buffered']
    %9 = vsyncpa [#allocation3], 0
    %10 = vsyncpa [#allocation6], 0
    %11 = vsyncpa [#allocation4], 0
    // Predicated region
    $region2: #{tpu_custom_call.1} parent=1 // pred_check
      _
    $region3: #{tpu_custom_call.1} parent=1 // pred_check_branch
      %13 = sbr.rel (0) target = $region5
    $region4: #{tpu_custom_call.1} parent=1 // pred_region
      %s15 = ssub.s32 128, 128
      %16 = vsyncadd [#allocation3], %s15
      %s18 = sshll.u32 [#allocation2], 4
      %s19 = int_to_ptr.vmem [resolvable:$true] %s18
      %21 = dma.hbm_to_vmem [thread:$0]  %s0, 128, %s19, [#allocation3]
    $region5: #{tpu_custom_call.1} parent=1 // pred_fallthru
      _
    // Predicated region
    $region6: #{tpu_custom_call.1} parent=1 // pred_check
      _
    $region7: #{tpu_custom_call.1} parent=1 // pred_check_branch
      %23 = sbr.rel (0) target = $region9
    $region8: #{tpu_custom_call.1} parent=1 // pred_region
      %s25 = ssub.s32 128, 128
      %26 = vsyncadd [#allocation6], %s25
      %s28 = sshll.u32 [#allocation5], 4
      %s29 = int_to_ptr.vmem [resolvable:$true] %s28
      %31 = dma.hbm_to_vmem [thread:$0]  %s1, 128, %s29, [#allocation6]
    $region9: #{tpu_custom_call.1} parent=1 // pred_fallthru
      _
    // Predicated region
    $region10: #{tpu_custom_call.1} parent=1 // pred_check
      _
    $region11: #{tpu_custom_call.1} parent=1 // pred_check_branch
      %33 = sbr.rel (0) target = $region13
    $region12: #{tpu_custom_call.1} parent=1 // pred_region
      %s35 = ssub.s32 128, 128
      %36 = vsyncadd [#allocation6], %s35
      %s38 = sshll.u32 [#allocation7], 4
      %s39 = int_to_ptr.vmem [resolvable:$true] %s38
      %41 = dma.hbm_to_vmem [thread:$0]  %s2, 128, %s39, [#allocation6]
    $region13: #{tpu_custom_call.1} parent=1 // pred_fallthru
      _
    // Predicated region
    $region14: #{tpu_custom_call.1} parent=1 // pred_check
      _
    $region15: #{tpu_custom_call.1} parent=1 // pred_check_branch
      %43 = sbr.rel (0) target = $region17
    $region16: #{tpu_custom_call.1} parent=1 // pred_region
      _
    $region17: #{tpu_custom_call.1} parent=1 // pred_fallthru
      _
    // Predicated region
    $region18: #{tpu_custom_call.1} parent=1 // pred_check
      _
    $region19: #{tpu_custom_call.1} parent=1 // pred_check_branch
      %45 = sbr.rel (0) target = $region21
    $region20: #{tpu_custom_call.1} parent=1 // pred_region
      %46 = dma.done [#allocation3], 128
    $region21: #{tpu_custom_call.1} parent=1 // pred_fallthru
      _
    // Predicated region
    $region22: #{tpu_custom_call.1} parent=1 // pred_check
      _
    $region23: #{tpu_custom_call.1} parent=1 // pred_check_branch
      %48 = sbr.rel (0) target = $region25
    $region24: #{tpu_custom_call.1} parent=1 // pred_region
      %49 = dma.done [#allocation6], 128
    $region25: #{tpu_custom_call.1} parent=1 // pred_fallthru
      _
    // Predicated region
    $region26: #{tpu_custom_call.1} parent=1 // pred_check
      _
    $region27: #{tpu_custom_call.1} parent=1 // pred_check_branch
      %51 = sbr.rel (0) target = $region29
    $region28: #{tpu_custom_call.1} parent=1 // pred_region
      %52 = dma.done [#allocation6], 128
    $region29: #{tpu_custom_call.1} parent=1 // pred_fallthru
      _
    %v53 = vld [vmem:[#allocation2] sm:$0xff]
    %vm54 = vcmask 130048
    %55 = vst.msk [vmem:[#allocation8] sm:$0xff] %vm54, %v53
    %v56 = vld [vmem:[#allocation5] sm:$0xff]
    %58 = vrot.lane.b32.xlu0 %v56, 16
    %v59 = vpop.permute.xlu0 %58
    %vm61 = vcmask 392320
    %62 = vst.msk [vmem:[#allocation8] sm:$0xff] %vm61, %v59
    %v63 = vld [vmem:[#allocation7] sm:$0xff]
    %65 = vrot.lane.b32.xlu0 %v63, 48
    %v66 = vpop.permute.xlu0 %65
    %vm68 = vcmask 654720
    %69 = vst.msk [vmem:[#allocation8] sm:$0xff] %vm68, %v66
    %v70 = vld [vmem:[%s3] sm:$0xff]
    %72 = vrot.lane.b32.xlu0 %v70, 80
    %v73 = vpop.permute.xlu0 %72
    %vm75 = vcmask 917120
    %76 = vst.msk [vmem:[#allocation8] sm:$0xff] %vm75, %v73
    // Predicated region
    $region30: #{tpu_custom_call.1} parent=1 // pred_check
      _
    $region31: #{tpu_custom_call.1} parent=1 // pred_check_branch
      %78 = sbr.rel (0) target = $region33
    $region32: #{tpu_custom_call.1} parent=1 // pred_region
      %s80 = ssub.s32 128, 128
      %81 = vsyncadd [#allocation4], %s80
      %s83 = sshll.u32 [#allocation8], 4
      %s84 = int_to_ptr.vmem [resolvable:$true] %s83
      %86 = dma.vmem_to_hbm [thread:$0]  %s84, 128, %s4, [#allocation4]
    $region33: #{tpu_custom_call.1} parent=1 // pred_fallthru
      _
    // Predicated region
    $region34: #{tpu_custom_call.1} parent=1 // pred_check
      _
    $region35: #{tpu_custom_call.1} parent=1 // pred_check_branch
      %88 = sbr.rel (0) target = $region37
    $region36: #{tpu_custom_call.1} parent=1 // pred_region
      %89 = dma.done [#allocation4], 128
    $region37: #{tpu_custom_call.1} parent=1 // pred_fallthru
      _
    %90 = vsyncpa [#allocation3], 1
    %91 = vsyncpa [#allocation6], 1
    %92 = vsyncpa [#allocation4], 1

</llo_original>
